<compile_context>
chip_gen: v7x
topology: tpu7x:2x2x1
jax: 0.10.0
libtpu: 0.0.40
codegen_flags: <defaults>
</compile_context>

<pallas_src>
import math

import jax
import jax.numpy as jnp
from jax import lax
from jax.experimental import pallas as pl
from jax.experimental.pallas import tpu as pltpu


# ------------------------------------------------------------------ helpers --

def _round_up(x, m):
    return ((x + m - 1) // m) * m


# Block budget counted in f32 *elements* (~3 MiB of f32 per pred block): large
# enough to amortize the ~0.35 us/step overhead (matters most on v7x's
# 3.2 TB/s HBM), small enough that double-buffered I/O plus the f32
# temporaries stay under the explicit scoped-VMEM limit on every generation
# (v7x physical VMEM = 64 MiB per TensorCore).
_BLOCK_ELEMS = 768 * 1024
_VMEM_LIMIT_BYTES = 48 * 1024 * 1024
_MAX_PACKED_WIDTH = 4096          # max lane-packed width groups * C


def _choose_tile_rows(m_rows, row_width):
    """Rows per block: multiple of 8, element-budgeted, and split into >= 2
    grid steps whenever possible (v7x has two TensorCores sharing the
    'parallel' grid axis)."""
    budget = max(8, (_BLOCK_ELEMS // max(row_width, 1)) // 8 * 8)
    half = _round_up(max(1, -(-m_rows // 2)), 8)
    return int(max(8, min(budget, half, _round_up(m_rows, 8))))


def _pow_static(x, gamma):
    """x ** gamma for x >= 0; integer gamma (default 2) uses VPU multiplies
    instead of the single-slot EUP exp(log()) path."""
    gi = int(round(gamma))
    if abs(gamma - gi) < 1e-12 and 0 <= gi <= 4:
        if gi == 0:
            return jnp.ones_like(x)
        r = x
        for _ in range(gi - 1):
            r = r * x
        return r
    return jnp.power(x, gamma)


def _soft_focal_math(p, is_pos, st, *, gamma, alpha):
    """Fused element-wise soft focal loss (positive / negative branches merged
    via selects); all math in f32."""
    pt = jnp.where(is_pos, jnp.abs(st - p), p)
    alpha_w = jnp.where(is_pos, alpha, 1.0 - alpha)
    # binary_cross_entropy on probabilities; log clamped at -100 like PyTorch.
    log_p = jnp.maximum(jnp.log(p), -100.0)
    log_1mp = jnp.maximum(jnp.log1p(-p), -100.0)
    bce = -(st * log_p + (1.0 - st) * log_1mp)
    return bce * alpha_w * _pow_static(pt, gamma)


# ------------------------------------------------------------------- kernel --

def _make_kernel(*, num_classes, groups, gamma, alpha, fused, has_weight,
                 n_rows, tile_m, mask_tail):
    """Builds the kernel.  pred/out blocks are (TM, W) with W = groups * C a
    multiple of 128 when groups > 1; label/score/weight are compact (TM, Gp).
    fused=True writes a (1, 8, 128) f32 partial-sum block instead of the loss."""
    c = num_classes

    def kernel(*refs):
        if has_weight:
            pred_ref, lab_ref, sc_ref, wrow_ref, out_ref = refs
        else:
            pred_ref, lab_ref, sc_ref, out_ref = refs

        p = pred_ref[...].astype(jnp.float32)                 # (TM, W)
        tm, w = p.shape
        lab = lab_ref[...].astype(jnp.float32)                # (TM, Gp)
        sc = sc_ref[...].astype(jnp.float32)                  # (TM, Gp)
        wrow = wrow_ref[...].astype(jnp.float32) if has_weight else None

        lane = lax.broadcasted_iota(jnp.int32, (1, w), 1)     # packed lane id
        cls = (lane % c).astype(jnp.float32)                  # class id / lane

        if groups == 1:
            # Classes already occupy the whole lane axis: compact (TM, 1)
            # label/score broadcast directly, no expansion needed.
            lab_w, sc_w, wrow_w = lab, sc, wrow
        else:
            gp = lab.shape[1]
            # Static 0/1 selector: sel[g, j] = 1 iff lane j belongs to group g
            # (lane j holds original row-group j // C, class j % C).  Rows past
            # the real group count (Gp padding) are all-zero automatically.
            lane_gw = lax.broadcasted_iota(jnp.int32, (gp, w), 1)
            grp_gw = lax.broadcasted_iota(jnp.int32, (gp, w), 0)
            sel = ((lane_gw >= grp_gw * c)
                   & (lane_gw < (grp_gw + 1) * c)).astype(jnp.float32)

            def expand(vals, splits):
                # Exact O(1)-in-groups lane expansion on the (otherwise idle)
                # MXU: each bf16-exact split of the compact values is scattered
                # with the 0/1 selector, so the result is bit-exact regardless
                # of the hardware matmul precision (bf16 passes or native f32).
                acc, rem = None, vals
                for _ in range(splits):
                    part = rem.astype(jnp.bfloat16).astype(jnp.float32)
                    rem = rem - part
                    term = jnp.dot(part, sel,
                                   preferred_element_type=jnp.float32)
                    acc = term if acc is None else acc + term
                return acc

            lab_w = expand(lab, 1 if c <= 256 else 2)          # small ints
            sc_w = expand(sc, 3)                               # full f32 mantissa
            wrow_w = expand(wrow, 3) if has_weight else None

        is_pos = lab_w == cls                                  # (TM, W)
        st = jnp.where(is_pos, sc_w, 0.0)                      # soft one-hot
        loss = _soft_focal_math(p, is_pos, st, gamma=gamma, alpha=alpha)
        if has_weight:
            loss = loss * wrow_w

        if fused:
            if mask_tail:
                # Exclude padded rows / ragged-last-block garbage from the sum.
                rid = (pl.program_id(0) * tile_m
                       + lax.broadcasted_iota(jnp.int32, (tm, 1), 0))
                orig_row = rid * groups + lane // c            # original row id
                loss = jnp.where(orig_row < n_rows, loss, 0.0)
            out_ref[...] = jnp.broadcast_to(jnp.sum(loss), out_ref.shape)
        else:
            out_ref[...] = loss.astype(out_ref.dtype)

    return kernel


# ------------------------------------------------------------ pallas driver --

def _run_soft_focal(pred, label, score, w_row, *, gamma, alpha, fused):
    """Runs the Pallas kernel.  fused=True returns an f32 scalar sum of the
    (optionally per-sample-weighted) loss; fused=False returns the (N, C)
    element-wise loss in pred's dtype."""
    n, c = pred.shape
    label = jnp.asarray(label, jnp.int32).reshape(n)
    score = jnp.asarray(score, jnp.float32).reshape(n)
    has_weight = w_row is not None
    if has_weight:
        w_row = jnp.asarray(w_row, jnp.float32).reshape(n)

    # Lane-pack the class axis: fold `groups` consecutive rows into lanes so
    # the kernel's last dim W = groups*C is a multiple of 128 (lane-dense
    # VPU/EUP/vst).  The packing is class-fastest / row-major, so the reshape
    # of pred is a free (layout-preserving) bitcast.
    groups = 128 // math.gcd(c, 128)
    if groups * c > _MAX_PACKED_WIDTH:
        groups = 1       # very large / awkward C: already (mostly) lane-dense
    width = groups * c

    # Pad rows only to a multiple of `groups`; ragged grid blocks and padded
    # rows are masked in-kernel, so N % groups == 0 means zero pad copies.
    n_pad = _round_up(n, groups)
    if n_pad != n:
        # TODO(synk): a pl.BoundedSlice tail block would avoid this pad copy.
        pred = jnp.pad(pred, ((0, n_pad - n), (0, 0)), constant_values=0.5)
        label = jnp.pad(label, (0, n_pad - n), constant_values=c)  # background
        score = jnp.pad(score, (0, n_pad - n))
        if has_weight:
            w_row = jnp.pad(w_row, (0, n_pad - n))
    m = n_pad // groups

    # Pad the compact group axis up to 8 (only when 1 < groups < 8) so the MXU
    # expansion sees a friendly contraction dim; extra columns select nothing.
    g_pad = groups if groups == 1 else max(groups, 8)

    def compact(x, fill):
        x2 = x.reshape(m, groups)
        if g_pad != groups:
            x2 = jnp.pad(x2, ((0, 0), (0, g_pad - groups)),
                         constant_values=fill)
        return x2

    lab_c = compact(label, c)
    sc_c = compact(score, 0.0)
    w_c = compact(w_row, 0.0) if has_weight else None

    tile_m = _choose_tile_rows(m, width)
    num_blocks = int(pl.cdiv(m, tile_m))
    mask_tail = (num_blocks * tile_m * groups) != n

    kernel = _make_kernel(num_classes=c, groups=groups, gamma=float(gamma),
                          alpha=float(alpha), fused=fused,
                          has_weight=has_weight, n_rows=n, tile_m=tile_m,
                          mask_tail=mask_tail)

    in_specs = [
        pl.BlockSpec((tile_m, width), lambda i: (i, 0)),
        pl.BlockSpec((tile_m, g_pad), lambda i: (i, 0)),
        pl.BlockSpec((tile_m, g_pad), lambda i: (i, 0)),
    ]
    args = [pred.reshape(m, width), lab_c, sc_c]
    if has_weight:
        in_specs.append(pl.BlockSpec((tile_m, g_pad), lambda i: (i, 0)))
        args.append(w_c)

    if fused:
        out_shape = jax.ShapeDtypeStruct((num_blocks, 8, 128), jnp.float32)
        out_specs = pl.BlockSpec((1, 8, 128), lambda i: (i, 0, 0))
    else:
        out_shape = jax.ShapeDtypeStruct((m, width), pred.dtype)
        out_specs = pl.BlockSpec((tile_m, width), lambda i: (i, 0))

    out = pl.pallas_call(
        kernel,
        out_shape=out_shape,
        grid_spec=pltpu.PrefetchScalarGridSpec(
            num_scalar_prefetch=0,
            grid=(num_blocks,),
            in_specs=in_specs,
            out_specs=out_specs),
        compiler_params=pltpu.CompilerParams(
            dimension_semantics=("parallel",),
            vmem_limit_bytes=_VMEM_LIMIT_BYTES),
    )(*args)

    if fused:
        return out[:, 0, 0].sum()            # f32 scalar, already weighted
    loss = out.reshape(n_pad, c)
    return loss if n_pad == n else loss[:n]


# ------------------------------------------------------ mmdet-style wrappers --

def soft_focal_loss_with_prob(pred, target_tuple, weight=None, gamma=2.0,
                              alpha=0.25, reduction='mean', avg_factor=None):
    """JAX/Pallas port of soft_focal_loss_with_prob (pred already activated).
    The torch .nonzero() + boolean masked assignment is replaced by an
    equivalent fully-masked formulation (no data-dependent gather needed)."""
    assert reduction in ('none', 'mean', 'sum')
    label, soft_target = target_tuple
    pred = jnp.asarray(pred)
    n, c = pred.shape

    w_row, w_full = None, None
    if weight is not None:
        weight = jnp.asarray(weight)
        if weight.size == n:
            w_row = weight.reshape(n)
        else:
            assert weight.size == n * c
            w_full = weight.reshape(n, c)

    if reduction in ('mean', 'sum') and w_full is None:
        # Fused path: only tiny per-block partial sums hit HBM; the weight
        # multiply and the accumulation happen in f32 inside the kernel.
        total = _run_soft_focal(pred, label, soft_target, w_row,
                                gamma=gamma, alpha=alpha, fused=True)
        if reduction == 'sum':
            if avg_factor is not None:
                raise ValueError(
                    'avg_factor can not be used with reduction="sum"')
            return total.astype(pred.dtype)
        denom = float(n * c) if avg_factor is None else avg_factor
        return (total / denom).astype(pred.dtype)

    # Element-wise path ('none', or rare full-shape weight).
    loss = _run_soft_focal(pred, label, soft_target, w_row,
                           gamma=gamma, alpha=alpha, fused=False)
    if w_full is not None:
        loss = loss * w_full.astype(loss.dtype)
    if reduction == 'none':
        return loss
    total = loss.astype(jnp.float32).sum()
    if reduction == 'sum':
        if avg_factor is not None:
            raise ValueError('avg_factor can not be used with reduction="sum"')
        return total.astype(pred.dtype)
    denom = float(n * c) if avg_factor is None else avg_factor
    return (total / denom).astype(pred.dtype)


class SoftFocalLoss:
    """JAX/Pallas port of mmdet SoftFocalLoss (sigmoid, activated=True path)."""

    def __init__(self, use_sigmoid=True, gamma=2.0, alpha=0.25,
                 reduction='mean', loss_weight=1.0, activated=False):
        assert use_sigmoid is True, 'Only sigmoid focal loss supported now.'
        self.use_sigmoid = use_sigmoid
        self.gamma = gamma
        self.alpha = alpha
        self.reduction = reduction
        self.loss_weight = loss_weight
        self.activated = activated

    def __call__(self, pred, target_tuple, weight=None, avg_factor=None,
                 reduction_override=None):
        assert reduction_override in (None, 'none', 'mean', 'sum')
        reduction = reduction_override if reduction_override else self.reduction
        if self.use_sigmoid:
            if self.activated:
                loss_cls = self.loss_weight * soft_focal_loss_with_prob(
                    pred, target_tuple, weight, gamma=self.gamma,
                    alpha=self.alpha, reduction=reduction,
                    avg_factor=avg_factor)
            else:
                # The logit (non-activated) branch also raises upstream.
                raise NotImplementedError
        else:
            raise NotImplementedError
        return loss_cls


# ------------------------------------------------------------------ self-test --

def _reference_soft_focal_with_prob(pred, label, score, gamma=2.0, alpha=0.25):
    """Pure-JAX mirror of the PyTorch reference (element-wise loss, f32)."""
    n, c = pred.shape
    pred = pred.astype(jnp.float32)
    onehot = ((label[:, None] >= 0) & (label[:, None] < c)
              & (label[:, None] == jnp.arange(c)[None, :]))
    t = onehot.astype(jnp.float32)
    st = jnp.where(onehot, score[:, None].astype(jnp.float32), 0.0)
    pt = jnp.abs(st - pred) * t + pred * (1.0 - t)
    fw = (alpha * t + (1.0 - alpha) * (1.0 - t)) * pt ** gamma
    bce = -(st * jnp.maximum(jnp.log(pred), -100.0)
            + (1.0 - st) * jnp.maximum(jnp.log1p(-pred), -100.0))
    return bce * fw


if __name__ == "__main__":
    key = jax.random.PRNGKey(0)
    ks = jax.random.split(key, 12)

    loss_mod = SoftFocalLoss(use_sigmoid=True, gamma=2.0, alpha=0.25,
                             reduction='mean', loss_weight=1.0, activated=True)

    # ---- test 1: packed path (C=16 -> groups=8, W=128), 'mean' + 'none' ----
    N, C = 64, 16
    pred = jax.nn.sigmoid(2.0 * jax.random.normal(ks[0], (N, C), jnp.float32))
    label = jax.random.randint(ks[1], (N,), 0, C + 1, dtype=jnp.int32)
    score = jax.random.uniform(ks[2], (N,), jnp.float32)

    out_mean = jax.block_until_ready(loss_mod(pred, (label, score)))
    out_none = jax.block_until_ready(
        loss_mod(pred, (label, score), reduction_override='none'))
    ref = _reference_soft_focal_with_prob(pred, label, score, 2.0, 0.25)
    assert jnp.allclose(out_none, ref, rtol=1e-5, atol=1e-6), "elem mismatch"
    assert jnp.allclose(out_mean, ref.mean(), rtol=2e-5, atol=1e-6), \
        (out_mean, ref.mean())

    # ---- test 2: awkward C (=10 -> groups=64, W=640), N % groups != 0,
    #              per-sample weight, fused 'sum' + weighted 'none' ----
    N2, C2 = 200, 10
    pred2 = jax.nn.sigmoid(1.5 * jax.random.normal(ks[3], (N2, C2), jnp.float32))
    label2 = jax.random.randint(ks[4], (N2,), 0, C2 + 1, dtype=jnp.int32)
    score2 = jax.random.uniform(ks[5], (N2,), jnp.float32)
    weight2 = jax.random.uniform(ks[6], (N2,), jnp.float32)

    out_sum = jax.block_until_ready(
        loss_mod(pred2, (label2, score2), weight=weight2,
                 reduction_override='sum'))
    ref2_elem = _reference_soft_focal_with_prob(pred2, label2, score2, 2.0, 0.25)
    ref2_sum = (ref2_elem * weight2[:, None]).sum()
    assert jnp.allclose(out_sum, ref2_sum, rtol=2e-5, atol=1e-3), \
        (out_sum, ref2_sum)

    out2_none = jax.block_until_ready(
        loss_mod(pred2, (label2, score2), weight=weight2,
                 reduction_override='none'))
    assert jnp.allclose(out2_none, ref2_elem * weight2[:, None],
                        rtol=1e-5, atol=1e-6), "weighted elem mismatch"

    # ---- test 3: groups == 1 path (C=128), ragged blocks, avg_factor ----
    N3, C3 = 40, 128
    pred3 = jax.nn.sigmoid(1.5 * jax.random.normal(ks[7], (N3, C3), jnp.float32))
    label3 = jax.random.randint(ks[8], (N3,), 0, C3 + 1, dtype=jnp.int32)
    score3 = jax.random.uniform(ks[9], (N3,), jnp.float32)

    out3 = jax.block_until_ready(
        loss_mod(pred3, (label3, score3), avg_factor=123.0))
    ref3 = _reference_soft_focal_with_prob(pred3, label3, score3,
                                           2.0, 0.25).sum() / 123.0
    assert jnp.allclose(out3, ref3, rtol=2e-5, atol=1e-4), (out3, ref3)

    # ---- test 4: bf16 pred through the fused 'mean' path ----
    pred4 = pred.astype(jnp.bfloat16)
    out4 = jax.block_until_ready(loss_mod(pred4, (label, score)))
    ref4 = _reference_soft_focal_with_prob(pred4.astype(jnp.float32),
                                           label, score, 2.0, 0.25).mean()
    assert jnp.allclose(out4.astype(jnp.float32), ref4, rtol=2e-2, atol=1e-3), \
        (out4, ref4)

    print("KERNEL_OK")
</pallas_src>

<mosaic_0001>
module attributes {stable_mosaic.version = 11 : i64} {
  func.func @kernel(%arg0: i32, %arg1: memref<8x128xf32, #tpu.memory_space<vmem>>, %arg2: memref<8x8xi32, #tpu.memory_space<vmem>>, %arg3: memref<8x8xf32, #tpu.memory_space<vmem>>, %arg4: memref<1x8x128xf32, #tpu.memory_space<vmem>>) attributes {dimension_semantics = [#tpu.dimension_semantics<parallel>], iteration_bounds = array<i64: 1>, scalar_prefetch = 0 : i64, scratch_operands = 0 : i64, tpu.core_type = #tpu.core_type<tc>, window_params = [{transform_indices = @transform_0, window_bounds = array<i64: 8, 128>}, {transform_indices = @transform_1, window_bounds = array<i64: 8, 8>}, {transform_indices = @transform_2, window_bounds = array<i64: 8, 8>}, {transform_indices = @transform_3, window_bounds = array<i64: 1, 8, 128>}]} {
    %c0 = arith.constant 0 : index
    %c0_0 = arith.constant 0 : index
    %0 = vector.load %arg1[%c0, %c0_0] : memref<8x128xf32, #tpu.memory_space<vmem>>, vector<8x128xf32>
    %c0_1 = arith.constant 0 : index
    %c0_2 = arith.constant 0 : index
    %1 = vector.load %arg2[%c0_1, %c0_2] : memref<8x8xi32, #tpu.memory_space<vmem>>, vector<8x8xi32>
    %2 = arith.sitofp %1 : vector<8x8xi32> to vector<8x8xf32>
    %c0_3 = arith.constant 0 : index
    %c0_4 = arith.constant 0 : index
    %3 = vector.load %arg3[%c0_3, %c0_4] : memref<8x8xf32, #tpu.memory_space<vmem>>, vector<8x8xf32>
    %4 = tpu.iota {dimensions = array<i32: 1>} : vector<1x128xi32>
    %c16_i32 = arith.constant 16 : i32
    %c0_i32 = arith.constant 0 : i32
    %5 = arith.cmpi eq, %c16_i32, %c0_i32 : i32
    %c1_i32 = arith.constant 1 : i32
    %6 = arith.select %5, %c1_i32, %c16_i32 : i32
    %7 = vector.broadcast %6 : i32 to vector<1x128xi32>
    %8 = arith.remsi %4, %7 : vector<1x128xi32>
    %c0_i32_5 = arith.constant 0 : i32
    %9 = vector.broadcast %c0_i32_5 : i32 to vector<1x128xi32>
    %10 = arith.cmpi ne, %8, %9 : vector<1x128xi32>
    %c0_i32_6 = arith.constant 0 : i32
    %11 = vector.broadcast %c0_i32_6 : i32 to vector<1x128xi32>
    %12 = arith.cmpi slt, %8, %11 : vector<1x128xi32>
    %c0_i32_7 = arith.constant 0 : i32
    %13 = arith.cmpi slt, %6, %c0_i32_7 : i32
    %14 = vector.broadcast %13 : i1 to vector<1x128xi1>
    %15 = vector.broadcast %14 : vector<1x128xi1> to vector<1x128xi1>
    %16 = arith.xori %12, %15 : vector<1x128xi1>
    %17 = arith.andi %16, %10 : vector<1x128xi1>
    %18 = vector.broadcast %6 : i32 to vector<1x128xi32>
    %19 = arith.addi %8, %18 : vector<1x128xi32>
    %20 = arith.select %17, %19, %8 : vector<1x128xi1>, vector<1x128xi32>
    %21 = arith.sitofp %20 : vector<1x128xi32> to vector<1x128xf32>
    %22 = tpu.iota {dimensions = array<i32: 1>} : vector<8x128xi32>
    %23 = tpu.iota {dimensions = array<i32: 0>} : vector<8x128xi32>
    %c16_i32_8 = arith.constant 16 : i32
    %24 = vector.broadcast %c16_i32_8 : i32 to vector<8x128xi32>
    %25 = arith.muli %23, %24 : vector<8x128xi32>
    %26 = arith.cmpi sge, %22, %25 : vector<8x128xi32>
    %c1_i32_9 = arith.constant 1 : i32
    %27 = vector.broadcast %c1_i32_9 : i32 to vector<8x128xi32>
    %28 = arith.addi %23, %27 : vector<8x128xi32>
    %c16_i32_10 = arith.constant 16 : i32
    %29 = vector.broadcast %c16_i32_10 : i32 to vector<8x128xi32>
    %30 = arith.muli %28, %29 : vector<8x128xi32>
    %31 = arith.cmpi slt, %22, %30 : vector<8x128xi32>
    %32 = arith.andi %26, %31 : vector<8x128xi1>
    %33 = arith.extui %32 : vector<8x128xi1> to vector<8x128xi32>
    %34 = arith.sitofp %33 : vector<8x128xi32> to vector<8x128xf32>
    %35 = arith.truncf %2 : vector<8x8xf32> to vector<8x8xbf16>
    %36 = arith.extf %35 : vector<8x8xbf16> to vector<8x8xf32>
    %cst = arith.constant dense<0.000000e+00> : vector<8x128xf32>
    %37 = tpu.matmul %36, %34, %cst {dimension_numbers = #tpu.dot_dimension_numbers<[1], [0], [0], [1], [0, 0, 1, 1], [], []>} : vector<8x8xf32>, vector<8x128xf32>, vector<8x128xf32> -> vector<8x128xf32>
    %38 = arith.truncf %3 : vector<8x8xf32> to vector<8x8xbf16>
    %39 = arith.extf %38 : vector<8x8xbf16> to vector<8x8xf32>
    %40 = arith.subf %3, %39 : vector<8x8xf32>
    %cst_11 = arith.constant dense<0.000000e+00> : vector<8x128xf32>
    %41 = tpu.matmul %39, %34, %cst_11 {dimension_numbers = #tpu.dot_dimension_numbers<[1], [0], [0], [1], [0, 0, 1, 1], [], []>} : vector<8x8xf32>, vector<8x128xf32>, vector<8x128xf32> -> vector<8x128xf32>
    %42 = arith.truncf %40 : vector<8x8xf32> to vector<8x8xbf16>
    %43 = arith.extf %42 : vector<8x8xbf16> to vector<8x8xf32>
    %44 = arith.subf %40, %43 : vector<8x8xf32>
    %cst_12 = arith.constant dense<0.000000e+00> : vector<8x128xf32>
    %45 = tpu.matmul %43, %34, %cst_12 {dimension_numbers = #tpu.dot_dimension_numbers<[1], [0], [0], [1], [0, 0, 1, 1], [], []>} : vector<8x8xf32>, vector<8x128xf32>, vector<8x128xf32> -> vector<8x128xf32>
    %46 = arith.addf %41, %45 : vector<8x128xf32>
    %47 = arith.truncf %44 : vector<8x8xf32> to vector<8x8xbf16>
    %48 = arith.extf %47 : vector<8x8xbf16> to vector<8x8xf32>
    %cst_13 = arith.constant dense<0.000000e+00> : vector<8x128xf32>
    %49 = tpu.matmul %48, %34, %cst_13 {dimension_numbers = #tpu.dot_dimension_numbers<[1], [0], [0], [1], [0, 0, 1, 1], [], []>} : vector<8x8xf32>, vector<8x128xf32>, vector<8x128xf32> -> vector<8x128xf32>
    %50 = arith.addf %46, %49 : vector<8x128xf32>
    %51 = vector.broadcast %21 : vector<1x128xf32> to vector<8x128xf32>
    %52 = arith.cmpf oeq, %37, %51 : vector<8x128xf32>
    %cst_14 = arith.constant 0.000000e+00 : f32
    %53 = vector.broadcast %cst_14 : f32 to vector<8x128xf32>
    %54 = arith.select %52, %50, %53 : vector<8x128xi1>, vector<8x128xf32>
    %55 = arith.subf %54, %0 : vector<8x128xf32>
    %56 = math.absf %55 : vector<8x128xf32>
    %57 = arith.select %52, %56, %0 : vector<8x128xi1>, vector<8x128xf32>
    %cst_15 = arith.constant 2.500000e-01 : f32
    %cst_16 = arith.constant 7.500000e-01 : f32
    %58 = vector.broadcast %cst_15 : f32 to vector<8x128xf32>
    %59 = vector.broadcast %cst_16 : f32 to vector<8x128xf32>
    %60 = arith.select %52, %58, %59 : vector<8x128xi1>, vector<8x128xf32>
    %61 = math.log %0 : vector<8x128xf32>
    %cst_17 = arith.constant -1.000000e+02 : f32
    %62 = vector.broadcast %cst_17 : f32 to vector<8x128xf32>
    %63 = arith.maximumf %61, %62 : vector<8x128xf32>
    %cst_18 = arith.constant 0.000000e+00 : f32
    %64 = vector.broadcast %cst_18 : f32 to vector<8x128xf32>
    %65 = arith.subf %64, %0 : vector<8x128xf32>
    %66 = math.log1p %65 : vector<8x128xf32>
    %cst_19 = arith.constant -1.000000e+02 : f32
    %67 = vector.broadcast %cst_19 : f32 to vector<8x128xf32>
    %68 = arith.maximumf %66, %67 : vector<8x128xf32>
    %69 = arith.mulf %54, %63 : vector<8x128xf32>
    %cst_20 = arith.constant 1.000000e+00 : f32
    %70 = vector.broadcast %cst_20 : f32 to vector<8x128xf32>
    %71 = arith.subf %70, %54 : vector<8x128xf32>
    %72 = arith.mulf %71, %68 : vector<8x128xf32>
    %73 = arith.addf %69, %72 : vector<8x128xf32>
    %cst_21 = arith.constant 0.000000e+00 : f32
    %74 = vector.broadcast %cst_21 : f32 to vector<8x128xf32>
    %75 = arith.subf %74, %73 : vector<8x128xf32>
    %76 = arith.mulf %75, %60 : vector<8x128xf32>
    %77 = arith.mulf %57, %57 : vector<8x128xf32>
    %78 = arith.mulf %76, %77 : vector<8x128xf32>
    %79 = vector.shape_cast %78 : vector<8x128xf32> to vector<1x8x128xf32>
    %cst_22 = arith.constant dense<0.000000e+00> : vector<1xf32>
    %80 = vector.multi_reduction <add>, %79, %cst_22 [1, 2] : vector<1x8x128xf32> to vector<1xf32>
    %81 = vector.shape_cast %80 : vector<1xf32> to vector<1x1x1xf32>
    %82 = vector.extract %81[0, 0, 0] : f32 from vector<1x1x1xf32>
    %83 = vector.broadcast %82 : f32 to vector<1x8x128xf32>
    %c0_23 = arith.constant 0 : index
    %c0_24 = arith.constant 0 : index
    %c0_25 = arith.constant 0 : index
    %84 = vector.load %arg4[%c0_23, %c0_24, %c0_25] : memref<1x8x128xf32, #tpu.memory_space<vmem>>, vector<1x8x128xf32>
    tpu.vector_store %arg4[%c0_23, %c0_24, %c0_25], %83 {strides = array<i32>} : memref<1x8x128xf32, #tpu.memory_space<vmem>>, vector<1x8x128xf32>,
    return
  }
  func.func @transform_0(%arg0: i32) -> (i32, i32) {
    %c0_i32 = arith.constant 0 : i32
    %c0_i32_0 = arith.constant 0 : i32
    return %arg0, %c0_i32 : i32, i32
  }
  func.func @transform_1(%arg0: i32) -> (i32, i32) {
    %c0_i32 = arith.constant 0 : i32
    %c0_i32_0 = arith.constant 0 : i32
    return %arg0, %c0_i32 : i32, i32
  }
  func.func @transform_2(%arg0: i32) -> (i32, i32) {
    %c0_i32 = arith.constant 0 : i32
    %c0_i32_0 = arith.constant 0 : i32
    return %arg0, %c0_i32 : i32, i32
  }
  func.func @transform_3(%arg0: i32) -> (i32, i32, i32) {
    %c0_i32 = arith.constant 0 : i32
    %c0_i32_0 = arith.constant 0 : i32
    %c0_i32_1 = arith.constant 0 : i32
    return %arg0, %c0_i32, %c0_i32_0 : i32, i32, i32
  }
}

</mosaic_0001>

<llo_original>
// kernel: tpu_custom_call.1
$region0: #{tpu_custom_call.1}
  #allocation0 [shape = 'u32[]', space=smem, size = 0x4, offset = 0x4, fixed_abs, tag = 'smem constant byte address 0x4 - core index']
  #allocation1 [shape = 'u32[144,128]{1,0:T(1,128)}', space=vmem, size = 0x12000, scoped, tag = 'internal scratch']
  %s0 = inlined_call_operand.hbm [shape: f32[8,128], index: 0, kind: input, shape index: {}]
  %s1 = inlined_call_operand.hbm [shape: s32[8,8], index: 1, kind: input, shape index: {}]
  %s2 = inlined_call_operand.hbm [shape: f32[8,8], index: 2, kind: input, shape index: {}]
  %s3 = inlined_call_operand.hbm [shape: f32[1,8,128], index: 3, kind: output, shape index: {}]
  %s4 = sld [smem:[#allocation0]]
  $region34: #{tpu_custom_call.1} parent=0
    _
  %s6 = ssub.s32 1, %s4
  %s7 = scalar_select 0, %s6, %s4
  $region1: #{tpu_custom_call.1} parent=0
    #allocation2 [shape = 'u8[4096]{0}', space=vmem, size = 0x1000, scoped, tag = 'input window, operand 0, single buffered']
    #allocation3 [shape = 's32[1]{0}', space=sflag, size = 0x4, scoped, tag = 'scoped memory for tpu_custom_call.1']
    #allocation4 [shape = 's32[1]{0}', space=sflag, size = 0x4, scoped, tag = 'scoped memory for tpu_custom_call.1']
    #allocation5 [shape = 'u8[4096]{0}', space=vmem, size = 0x1000, scoped, tag = 'input window, operand 1, single buffered']
    #allocation6 [shape = 's32[1]{0}', space=sflag, size = 0x4, scoped, tag = 'scoped memory for tpu_custom_call.1']
    #allocation7 [shape = 'u8[4096]{0}', space=vmem, size = 0x1000, scoped, tag = 'input window, operand 2, single buffered']
    #allocation8 [shape = 'u8[4096]{0}', space=vmem, size = 0x1000, scoped, tag = 'output window, operand 0, single buffered']
    %8 = vsyncpa [#allocation3], 0
    %9 = vsyncpa [#allocation6], 0
    %10 = vsyncpa [#allocation4], 0
    // Predicated region
    $region2: #{tpu_custom_call.1} parent=1 // pred_check
      _
    $region3: #{tpu_custom_call.1} parent=1 // pred_check_branch
      %12 = sbr.rel (0) target = $region5
    $region4: #{tpu_custom_call.1} parent=1 // pred_region
      %s14 = ssub.s32 128, 128
      %15 = vsyncadd [#allocation3], %s14
      %s17 = sshll.u32 [#allocation2], 4
      %s18 = int_to_ptr.vmem [resolvable:$true] %s17
      %20 = dma.hbm_to_vmem [thread:$0]  %s0, 128, %s18, [#allocation3]
    $region5: #{tpu_custom_call.1} parent=1 // pred_fallthru
      _
    // Predicated region
    $region6: #{tpu_custom_call.1} parent=1 // pred_check
      _
    $region7: #{tpu_custom_call.1} parent=1 // pred_check_branch
      %22 = sbr.rel (0) target = $region9
    $region8: #{tpu_custom_call.1} parent=1 // pred_region
      %s24 = ssub.s32 128, 128
      %25 = vsyncadd [#allocation6], %s24
      %s27 = sshll.u32 [#allocation5], 4
      %s28 = int_to_ptr.vmem [resolvable:$true] %s27
      %30 = dma.hbm_to_vmem [thread:$0]  %s1, 128, %s28, [#allocation6]
    $region9: #{tpu_custom_call.1} parent=1 // pred_fallthru
      _
    // Predicated region
    $region10: #{tpu_custom_call.1} parent=1 // pred_check
      _
    $region11: #{tpu_custom_call.1} parent=1 // pred_check_branch
      %32 = sbr.rel (0) target = $region13
    $region12: #{tpu_custom_call.1} parent=1 // pred_region
      %s34 = ssub.s32 128, 128
      %35 = vsyncadd [#allocation6], %s34
      %s37 = sshll.u32 [#allocation7], 4
      %s38 = int_to_ptr.vmem [resolvable:$true] %s37
      %40 = dma.hbm_to_vmem [thread:$0]  %s2, 128, %s38, [#allocation6]
    $region13: #{tpu_custom_call.1} parent=1 // pred_fallthru
      _
    // Predicated region
    $region14: #{tpu_custom_call.1} parent=1 // pred_check
      _
    $region15: #{tpu_custom_call.1} parent=1 // pred_check_branch
      %42 = sbr.rel (0) target = $region17
    $region16: #{tpu_custom_call.1} parent=1 // pred_region
      %43 = dma.done [#allocation3], 128
    $region17: #{tpu_custom_call.1} parent=1 // pred_fallthru
      _
    // Predicated region
    $region18: #{tpu_custom_call.1} parent=1 // pred_check
      _
    $region19: #{tpu_custom_call.1} parent=1 // pred_check_branch
      %45 = sbr.rel (0) target = $region21
    $region20: #{tpu_custom_call.1} parent=1 // pred_region
      %46 = dma.done [#allocation6], 128
    $region21: #{tpu_custom_call.1} parent=1 // pred_fallthru
      _
    // Predicated region
    $region22: #{tpu_custom_call.1} parent=1 // pred_check
      _
    $region23: #{tpu_custom_call.1} parent=1 // pred_check_branch
      %48 = sbr.rel (0) target = $region25
    $region24: #{tpu_custom_call.1} parent=1 // pred_region
      %49 = dma.done [#allocation6], 128
    $region25: #{tpu_custom_call.1} parent=1 // pred_fallthru
      _
    %v50 = vld [vmem:[#allocation2] sm:$0xff]
    %v51 = vld [vmem:[#allocation5] sm:$0xff]
    %v52 = vld [vmem:[#allocation7] sm:$0xff]
    %v53 = vlaneseq
    %v54 = vand.u32 %v53, 127
    %vm55 = vcmp.lt.s32.totalorder %v54, 0
    %v56 = vsub.s32 0, %v54
    %v57 = vsel %vm55, %v56, %v54
    %v58 = vshrl.u32 %v57, 4
    %v59 = vand.u32 %v57, 15
    %v60 = vsub.s32 0, %v59
    %v61 = vsel %vm55, %v60, %v59
    %vm62 = vcmp.ne.s32.totalorder %v61, 0
    %vm63 = vcmp.lt.s32.totalorder %v61, 0
    %vm64 = vmand %vm63, %vm62
    %v65 = vadd.s32 %v61, 16
    %v66 = vsel %vm64, %v65, %v61
    %v67 = vcvt.s32.f32 %v66
    %v68 = vlaneseq
    %v69 = vshrl.u32 %v68, 7
    %v70 = vmul.u32 %v69, 16
    %vm71 = vcmp.ge.s32.totalorder %v54, %v70
    %v72 = vadd.s32 %v69, 1
    %v73 = vmul.u32 %v72, 16
    %vm74 = vcmp.lt.s32.totalorder %v54, %v73
    %vm75 = vmand %vm71, %vm74
    %v76 = vsel %vm75, 1, 0
    %v77 = vcvt.s32.f32 %v76
    %v78 = vcvt.s32.f32 %v51
    %v79 = vpack.c.bf16 %v78, %v78
    %v80 = vunpack.c.l.bf16 %v79
    %vm81 = vcmask 64512
    %v83 = vsel %vm81, %v80, 0
    %85 = vmatprep.subr.mxu0 0.0
    %86 = vmatpush1.msra.mxu0 %v77
    %87 = vmatprep.subr.mxu0 0.0
    %88 = vmatpush1.msra.mxu0 0.0
    %89 = vmatprep.subr.mxu0 0.0
    %90 = vmatpush1.msra.mxu0 0.0
    %91 = vmatprep.subr.mxu0 0.0
    %92 = vmatpush1.msra.mxu0 0.0
    %93 = vmatprep.subr.mxu0 0.0
    %94 = vmatpush1.msra.mxu0 0.0
    %95 = vmatprep.subr.mxu0 0.0
    %96 = vmatpush1.msra.mxu0 0.0
    %97 = vmatprep.subr.mxu0 0.0
    %98 = vmatpush1.msra.mxu0 0.0
    %99 = vmatprep.subr.mxu0 0.0
    %100 = vmatpush1.msra.mxu0 0.0
    %101 = vmatprep.subr.mxu0 0.0
    %102 = vmatpush1.msra.mxu0 0.0
    %103 = vmatprep.subr.mxu0 0.0
    %104 = vmatpush1.msra.mxu0 0.0
    %105 = vmatprep.subr.mxu0 0.0
    %106 = vmatpush1.msra.mxu0 0.0
    %107 = vmatprep.subr.mxu0 0.0
    %108 = vmatpush1.msra.mxu0 0.0
    %109 = vmatprep.subr.mxu0 0.0
    %110 = vmatpush1.msra.mxu0 0.0
    %111 = vmatprep.subr.mxu0 0.0
    %112 = vmatpush1.msra.mxu0 0.0
    %113 = vmatprep.subr.mxu0 0.0
    %114 = vmatpush1.msra.mxu0 0.0
    %115 = vmatprep.subr.mxu0 0.0
    %116 = vmatpush1.msra.mxu0 0.0
    %117 = vmatprep.subr.mxu0 0.0
    %118 = vmatpush1.msra.mxu0 0.0
    %119 = vmatprep.subr.mxu0 0.0
    %120 = vmatpush1.msra.mxu0 0.0
    %121 = vmatprep.subr.mxu0 0.0
    %122 = vmatpush1.msra.mxu0 0.0
    %123 = vmatprep.subr.mxu0 0.0
    %124 = vmatpush1.msra.mxu0 0.0
    %125 = vmatprep.subr.mxu0 0.0
    %126 = vmatpush1.msra.mxu0 0.0
    %127 = vmatprep.subr.mxu0 0.0
    %128 = vmatpush1.msra.mxu0 0.0
    %129 = vmatprep.subr.mxu0 0.0
    %130 = vmatpush1.msra.mxu0 0.0
    %131 = vmatprep.subr.mxu0 0.0
    %132 = vmatpush1.msra.mxu0 0.0
    %133 = vmatprep.subr.mxu0 0.0
    %134 = vmatpush1.msra.mxu0 0.0
    %135 = vmatprep.subr.mxu0 0.0
    %136 = vmatpush1.msra.mxu0 0.0
    %137 = vmatprep.subr.mxu0 0.0
    %138 = vmatpush1.msra.mxu0 0.0
    %139 = vmatprep.subr.mxu0 0.0
    %140 = vmatpush1.msra.mxu0 0.0
    %141 = vmatprep.subr.mxu0 0.0
    %142 = vmatpush1.msra.mxu0 0.0
    %143 = vmatprep.subr.mxu0 0.0
    %144 = vmatpush1.msra.mxu0 0.0
    %145 = vmatprep.subr.mxu0 0.0
    %146 = vmatpush1.msra.mxu0 0.0
    %147 = vmatprep.subr.mxu0 0.0
    %148 = vmatpush1.msra.mxu0 0.0
    %149 = vmatprep.mubr.f32.mxu0 0.0
    %150 = vmatmul.mubr.f32.gmra.mrb[0].mxu0 %v83
    %v151 = vpop.f32.mrb[0].mxu0
    %v152 = vadd.f32 0.0, %v151
    %v153 = vpop.f32.mrb[0].mxu0
    %154 = vdwg.mxu0
    %v155 = vpack.c.bf16 %v52, %v52
    %v156 = vunpack.c.l.bf16 %v155
    %v157 = vsub.f32 %v52, %v156
    %v158 = vpack.c.bf16 %v157, %v157
    %v159 = vunpack.c.l.bf16 %v158
    %v160 = vsub.f32 %v157, %v159
    %v162 = vsel %vm81, %v159, 0
    %164 = vmatprep.subr.mxu0 0.0
    %165 = vmatpush1.msra.mxu0 %v77
    %166 = vmatprep.subr.mxu0 0.0
    %167 = vmatpush1.msra.mxu0 0.0
    %168 = vmatprep.subr.mxu0 0.0
    %169 = vmatpush1.msra.mxu0 0.0
    %170 = vmatprep.subr.mxu0 0.0
    %171 = vmatpush1.msra.mxu0 0.0
    %172 = vmatprep.subr.mxu0 0.0
    %173 = vmatpush1.msra.mxu0 0.0
    %174 = vmatprep.subr.mxu0 0.0
    %175 = vmatpush1.msra.mxu0 0.0
    %176 = vmatprep.subr.mxu0 0.0
    %177 = vmatpush1.msra.mxu0 0.0
    %178 = vmatprep.subr.mxu0 0.0
    %179 = vmatpush1.msra.mxu0 0.0
    %180 = vmatprep.subr.mxu0 0.0
    %181 = vmatpush1.msra.mxu0 0.0
    %182 = vmatprep.subr.mxu0 0.0
    %183 = vmatpush1.msra.mxu0 0.0
    %184 = vmatprep.subr.mxu0 0.0
    %185 = vmatpush1.msra.mxu0 0.0
    %186 = vmatprep.subr.mxu0 0.0
    %187 = vmatpush1.msra.mxu0 0.0
    %188 = vmatprep.subr.mxu0 0.0
    %189 = vmatpush1.msra.mxu0 0.0
    %190 = vmatprep.subr.mxu0 0.0
    %191 = vmatpush1.msra.mxu0 0.0
    %192 = vmatprep.subr.mxu0 0.0
    %193 = vmatpush1.msra.mxu0 0.0
    %194 = vmatprep.subr.mxu0 0.0
    %195 = vmatpush1.msra.mxu0 0.0
    %196 = vmatprep.subr.mxu0 0.0
    %197 = vmatpush1.msra.mxu0 0.0
    %198 = vmatprep.subr.mxu0 0.0
    %199 = vmatpush1.msra.mxu0 0.0
    %200 = vmatprep.subr.mxu0 0.0
    %201 = vmatpush1.msra.mxu0 0.0
    %202 = vmatprep.subr.mxu0 0.0
    %203 = vmatpush1.msra.mxu0 0.0
    %204 = vmatprep.subr.mxu0 0.0
    %205 = vmatpush1.msra.mxu0 0.0
    %206 = vmatprep.subr.mxu0 0.0
    %207 = vmatpush1.msra.mxu0 0.0
    %208 = vmatprep.subr.mxu0 0.0
    %209 = vmatpush1.msra.mxu0 0.0
    %210 = vmatprep.subr.mxu0 0.0
    %211 = vmatpush1.msra.mxu0 0.0
    %212 = vmatprep.subr.mxu0 0.0
    %213 = vmatpush1.msra.mxu0 0.0
    %214 = vmatprep.subr.mxu0 0.0
    %215 = vmatpush1.msra.mxu0 0.0
    %216 = vmatprep.subr.mxu0 0.0
    %217 = vmatpush1.msra.mxu0 0.0
    %218 = vmatprep.subr.mxu0 0.0
    %219 = vmatpush1.msra.mxu0 0.0
    %220 = vmatprep.subr.mxu0 0.0
    %221 = vmatpush1.msra.mxu0 0.0
    %222 = vmatprep.subr.mxu0 0.0
    %223 = vmatpush1.msra.mxu0 0.0
    %224 = vmatprep.subr.mxu0 0.0
    %225 = vmatpush1.msra.mxu0 0.0
    %226 = vmatprep.subr.mxu0 0.0
    %227 = vmatpush1.msra.mxu0 0.0
    %228 = vmatprep.mubr.f32.mxu0 0.0
    %229 = vmatmul.mubr.f32.gmra.mrb[0].mxu0 %v162
    %v230 = vpop.f32.mrb[0].mxu0
    %v231 = vadd.f32 0.0, %v230
    %v232 = vpop.f32.mrb[0].mxu0
    %233 = vdwg.mxu0
    %v235 = vsel %vm81, %v156, 0
    %237 = vmatprep.subr.mxu0 0.0
    %238 = vmatpush1.msra.mxu0 %v77
    %239 = vmatprep.subr.mxu0 0.0
    %240 = vmatpush1.msra.mxu0 0.0
    %241 = vmatprep.subr.mxu0 0.0
    %242 = vmatpush1.msra.mxu0 0.0
    %243 = vmatprep.subr.mxu0 0.0
    %244 = vmatpush1.msra.mxu0 0.0
    %245 = vmatprep.subr.mxu0 0.0
    %246 = vmatpush1.msra.mxu0 0.0
    %247 = vmatprep.subr.mxu0 0.0
    %248 = vmatpush1.msra.mxu0 0.0
    %249 = vmatprep.subr.mxu0 0.0
    %250 = vmatpush1.msra.mxu0 0.0
    %251 = vmatprep.subr.mxu0 0.0
    %252 = vmatpush1.msra.mxu0 0.0
    %253 = vmatprep.subr.mxu0 0.0
    %254 = vmatpush1.msra.mxu0 0.0
    %255 = vmatprep.subr.mxu0 0.0
    %256 = vmatpush1.msra.mxu0 0.0
    %257 = vmatprep.subr.mxu0 0.0
    %258 = vmatpush1.msra.mxu0 0.0
    %259 = vmatprep.subr.mxu0 0.0
    %260 = vmatpush1.msra.mxu0 0.0
    %261 = vmatprep.subr.mxu0 0.0
    %262 = vmatpush1.msra.mxu0 0.0
    %263 = vmatprep.subr.mxu0 0.0
    %264 = vmatpush1.msra.mxu0 0.0
    %265 = vmatprep.subr.mxu0 0.0
    %266 = vmatpush1.msra.mxu0 0.0
    %267 = vmatprep.subr.mxu0 0.0
    %268 = vmatpush1.msra.mxu0 0.0
    %269 = vmatprep.subr.mxu0 0.0
    %270 = vmatpush1.msra.mxu0 0.0
    %271 = vmatprep.subr.mxu0 0.0
    %272 = vmatpush1.msra.mxu0 0.0
    %273 = vmatprep.subr.mxu0 0.0
    %274 = vmatpush1.msra.mxu0 0.0
    %275 = vmatprep.subr.mxu0 0.0
    %276 = vmatpush1.msra.mxu0 0.0
    %277 = vmatprep.subr.mxu0 0.0
    %278 = vmatpush1.msra.mxu0 0.0
    %279 = vmatprep.subr.mxu0 0.0
    %280 = vmatpush1.msra.mxu0 0.0
    %281 = vmatprep.subr.mxu0 0.0
    %282 = vmatpush1.msra.mxu0 0.0
    %283 = vmatprep.subr.mxu0 0.0
    %284 = vmatpush1.msra.mxu0 0.0
    %285 = vmatprep.subr.mxu0 0.0
    %286 = vmatpush1.msra.mxu0 0.0
    %287 = vmatprep.subr.mxu0 0.0
    %288 = vmatpush1.msra.mxu0 0.0
    %289 = vmatprep.subr.mxu0 0.0
    %290 = vmatpush1.msra.mxu0 0.0
    %291 = vmatprep.subr.mxu0 0.0
    %292 = vmatpush1.msra.mxu0 0.0
    %293 = vmatprep.subr.mxu0 0.0
    %294 = vmatpush1.msra.mxu0 0.0
    %295 = vmatprep.subr.mxu0 0.0
    %296 = vmatpush1.msra.mxu0 0.0
    %297 = vmatprep.subr.mxu0 0.0
    %298 = vmatpush1.msra.mxu0 0.0
    %299 = vmatprep.subr.mxu0 0.0
    %300 = vmatpush1.msra.mxu0 0.0
    %301 = vmatprep.mubr.f32.mxu0 0.0
    %302 = vmatmul.mubr.f32.gmra.mrb[0].mxu0 %v235
    %v303 = vpop.f32.mrb[0].mxu0
    %v304 = vadd.f32 %v231, %v303
    %v305 = vpop.f32.mrb[0].mxu0
    %306 = vdwg.mxu0
    %v307 = vpack.c.bf16 %v160, %v160
    %v308 = vunpack.c.l.bf16 %v307
    %v310 = vsel %vm81, %v308, 0
    %312 = vmatprep.subr.mxu0 0.0
    %313 = vmatpush1.msra.mxu0 %v77
    %314 = vmatprep.subr.mxu0 0.0
    %315 = vmatpush1.msra.mxu0 0.0
    %316 = vmatprep.subr.mxu0 0.0
    %317 = vmatpush1.msra.mxu0 0.0
    %318 = vmatprep.subr.mxu0 0.0
    %319 = vmatpush1.msra.mxu0 0.0
    %320 = vmatprep.subr.mxu0 0.0
    %321 = vmatpush1.msra.mxu0 0.0
    %322 = vmatprep.subr.mxu0 0.0
    %323 = vmatpush1.msra.mxu0 0.0
    %324 = vmatprep.subr.mxu0 0.0
    %325 = vmatpush1.msra.mxu0 0.0
    %326 = vmatprep.subr.mxu0 0.0
    %327 = vmatpush1.msra.mxu0 0.0
    %328 = vmatprep.subr.mxu0 0.0
    %329 = vmatpush1.msra.mxu0 0.0
    %330 = vmatprep.subr.mxu0 0.0
    %331 = vmatpush1.msra.mxu0 0.0
    %332 = vmatprep.subr.mxu0 0.0
    %333 = vmatpush1.msra.mxu0 0.0
    %334 = vmatprep.subr.mxu0 0.0
    %335 = vmatpush1.msra.mxu0 0.0
    %336 = vmatprep.subr.mxu0 0.0
    %337 = vmatpush1.msra.mxu0 0.0
    %338 = vmatprep.subr.mxu0 0.0
    %339 = vmatpush1.msra.mxu0 0.0
    %340 = vmatprep.subr.mxu0 0.0
    %341 = vmatpush1.msra.mxu0 0.0
    %342 = vmatprep.subr.mxu0 0.0
    %343 = vmatpush1.msra.mxu0 0.0
    %344 = vmatprep.subr.mxu0 0.0
    %345 = vmatpush1.msra.mxu0 0.0
    %346 = vmatprep.subr.mxu0 0.0
    %347 = vmatpush1.msra.mxu0 0.0
    %348 = vmatprep.subr.mxu0 0.0
    %349 = vmatpush1.msra.mxu0 0.0
    %350 = vmatprep.subr.mxu0 0.0
    %351 = vmatpush1.msra.mxu0 0.0
    %352 = vmatprep.subr.mxu0 0.0
    %353 = vmatpush1.msra.mxu0 0.0
    %354 = vmatprep.subr.mxu0 0.0
    %355 = vmatpush1.msra.mxu0 0.0
    %356 = vmatprep.subr.mxu0 0.0
    %357 = vmatpush1.msra.mxu0 0.0
    %358 = vmatprep.subr.mxu0 0.0
    %359 = vmatpush1.msra.mxu0 0.0
    %360 = vmatprep.subr.mxu0 0.0
    %361 = vmatpush1.msra.mxu0 0.0
    %362 = vmatprep.subr.mxu0 0.0
    %363 = vmatpush1.msra.mxu0 0.0
    %364 = vmatprep.subr.mxu0 0.0
    %365 = vmatpush1.msra.mxu0 0.0
    %366 = vmatprep.subr.mxu0 0.0
    %367 = vmatpush1.msra.mxu0 0.0
    %368 = vmatprep.subr.mxu0 0.0
    %369 = vmatpush1.msra.mxu0 0.0
    %370 = vmatprep.subr.mxu0 0.0
    %371 = vmatpush1.msra.mxu0 0.0
    %372 = vmatprep.subr.mxu0 0.0
    %373 = vmatpush1.msra.mxu0 0.0
    %374 = vmatprep.subr.mxu0 0.0
    %375 = vmatpush1.msra.mxu0 0.0
    %376 = vmatprep.mubr.f32.mxu0 0.0
    %377 = vmatmul.mubr.f32.gmra.mrb[0].mxu0 %v310
    %v378 = vpop.f32.mrb[0].mxu0
    %v379 = vadd.f32 0.0, %v378
    %v380 = vpop.f32.mrb[0].mxu0
    %381 = vdwg.mxu0
    %v382 = vadd.f32 %v304, %v379
    %vm383 = vcmp.eq.f32.partialorder %v152, %v67
    %v384 = vsel %vm383, %v382, 0.0
    %v385 = vsub.f32 %v384, %v50
    %v386 = vand.u32 2147483647, %v385
    %v387 = vsel %vm383, %v386, %v50
    %v388 = vsel %vm383, 0.25, 0.75
    %v389 = vlog2.pop %v50
    %v390 = vmul.f32 %v389, 0.6931472
    %v391 = vmax.f32 %v390, -100.0
    %v392 = vsub.f32 0.0, %v50
    %v393 = vadd.f32 %v392, 1.0
    %v394 = vlog2.pop %v393
    %v395 = vmul.f32 %v394, 0.6931472
    %v396 = vmul.f32 -0.5, %v392
    %v397 = vadd.f32 %v396, 1.0
    %v398 = vmul.f32 %v397, %v392
    %v399 = vand.u32 2147483647, %v392
    %vm400 = vcmp.lt.f32.partialorder %v399, 0.0004427343
    %v401 = vsel %vm400, %v398, %v395
    %v402 = vmax.f32 %v401, -100.0
    %v403 = vmul.f32 %v384, %v391
    %v404 = vsub.f32 1.0, %v384
    %v405 = vmul.f32 %v404, %v402
    %v406 = vadd.f32 %v403, %v405
    %v407 = vsub.f32 0.0, %v406
    %v408 = vmul.f32 %v407, %v388
    %v409 = vmul.f32 %v387, %v387
    %v410 = vmul.f32 %v408, %v409
    %411 = vadd.xlane.f32.xlu0 %v410
    %v412 = vpop.xlane.xlu0 %411
    %v413 = vrot.slane %v412, 4
    %v414 = vadd.f32 %v412, %v413
    %v415 = vrot.slane %v414, 2
    %v416 = vadd.f32 %v414, %v415
    %v417 = vrot.slane %v416, 1
    %v418 = vadd.f32 %v416, %v417
    %s419 = vtos %v418
    %v420 = vstv %s419
    %421 = vst [vmem:[#allocation8] sm:$0xff] %v420
    // Predicated region
    $region26: #{tpu_custom_call.1} parent=1 // pred_check
      _
    $region27: #{tpu_custom_call.1} parent=1 // pred_check_branch
      %423 = sbr.rel (0) target = $region29
    $region28: #{tpu_custom_call.1} parent=1 // pred_region
      %s425 = ssub.s32 128, 128
      %426 = vsyncadd [#allocation4], %s425
      %s428 = sshll.u32 [#allocation8], 4
      %s429 = int_to_ptr.vmem [resolvable:$true] %s428
      %431 = dma.vmem_to_hbm [thread:$0]  %s429, 128, %s3, [#allocation4]
    $region29: #{tpu_custom_call.1} parent=1 // pred_fallthru
      _
    // Predicated region
    $region30: #{tpu_custom_call.1} parent=1 // pred_check
      _
    $region31: #{tpu_custom_call.1} parent=1 // pred_check_branch
      %433 = sbr.rel (0) target = $region33
    $region32: #{tpu_custom_call.1} parent=1 // pred_region
      %434 = dma.done [#allocation4], 128
    $region33: #{tpu_custom_call.1} parent=1 // pred_fallthru
      _
    %435 = vsyncpa [#allocation3], 1
    %436 = vsyncpa [#allocation6], 1
    %437 = vsyncpa [#allocation4], 1

</llo_original>
